<compile_context>
chip_gen: v7x
topology: tpu7x:2x2x1
jax: 0.10.0
libtpu: 0.0.40
codegen_flags: <defaults>
</compile_context>

<pallas_src>
import functools

import jax
import jax.numpy as jnp
from jax.experimental import pallas as pl
from jax.experimental.pallas import tpu as pltpu


def _round_up(x, m):
    return ((x + m - 1) // m) * m


def _device_vmem_bytes():
    """Physical VMEM per TensorCore; conservative 64 MiB fallback (safe on all gens)."""
    try:
        return int(pltpu.get_tpu_info().vmem_capacity_bytes)
    except Exception:
        return 64 * 1024 * 1024


def _resident_vmem_bytes(E, H, tm, out_itemsize):
    """VMEM estimate for the weights-resident fast path (weights counted as
    double-buffered to stay conservative; dims rounded to layout tiles)."""
    Ep, Hp = _round_up(E, 128), _round_up(H, 128)
    w = 2 * (Ep * Hp * 2 + Hp * Ep * 2)               # W1 + W2 (bf16), 2 bufs
    b = 2 * (Hp * 4 + Ep * 4)                         # b1 + b2 (f32)
    xo = 2 * tm * Ep * 2 + 2 * tm * Ep * out_itemsize  # x (bf16) + out, 2 bufs
    inter = tm * Hp * 6                                # f32 h + bf16 cast copy
    return w + b + xo + inter


def _chunked_vmem_bytes(E, tm, th, out_itemsize):
    """VMEM estimate for one step of the hidden-dim-streaming path."""
    Ep = _round_up(E, 128)
    w = 2 * (Ep * th * 2 + th * Ep * 2)                # W1/W2 chunks, 2 bufs
    b = 2 * (th * 4 + Ep * 4)                          # b1 chunk + b2
    xo = 2 * tm * Ep * 2 + 2 * tm * Ep * out_itemsize  # x + out tiles, 2 bufs
    acc = tm * Ep * 4                                  # f32 accumulator scratch
    inter = tm * th * 6                                # f32 h + bf16 cast copy
    return w + b + xo + acc + inter


def _select_tm(M, tm_target):
    """Row tile: bf16-sublane aligned (16); split into >=2 tiles for large M so
    the 'parallel' axis can be sharded across v7x's two TensorCores."""
    tm = min(tm_target, _round_up(M, 16))
    tm = max(16, _round_up(tm, 16))
    if _round_up(M, tm) <= tm and M > 512:
        tm = max(256, _round_up(pl.cdiv(M, 2), 256))
    return tm


def _select_th(E, H, tm, out_itemsize, budget, th_target):
    """Largest 128-aligned hidden chunk that fits the per-generation budget."""
    th = max(128, (min(th_target, _round_up(H, 128)) // 128) * 128)
    while th > 128 and _chunked_vmem_bytes(E, tm, th, out_itemsize) > budget:
        th -= 128
    return th


def ffn_kernel_resident(x_ref, w1_ref, b1_ref, w2_ref, b2_ref, o_ref):
    # Weights fully VMEM-resident (constant block index => DMA'd once).
    # x_ref: (TM, E) bf16 | w1_ref: (E, H) bf16 | b1_ref: (1, H) f32
    # w2_ref: (H, E) bf16 | b2_ref: (1, E) f32  | o_ref: (TM, E)
    h = jnp.dot(x_ref[...], w1_ref[...],
                preferred_element_type=jnp.float32) + b1_ref[...]
    h = jnp.maximum(h, 0.0)                                   # ReLU in f32
    y = jnp.dot(h.astype(w2_ref.dtype), w2_ref[...],
                preferred_element_type=jnp.float32) + b2_ref[...]
    # TODO(synk): training-mode Dropout not implemented (eval = identity);
    # would use pltpu.prng_seed + pltpu.prng_random_bits here.
    o_ref[...] = y.astype(o_ref.dtype)


def ffn_kernel_chunked(x_ref, w1_ref, b1_ref, w2_ref, b2_ref, o_ref, acc_ref):
    # Hidden dim streamed in chunks along grid axis 1 ("arbitrary").
    # x_ref: (TM, E) | w1_ref: (E, TH) | b1_ref: (1, TH) | w2_ref: (TH, E)
    # b2_ref: (1, E) | o_ref: (TM, E)  | acc_ref: (TM, E) f32 scratch
    k = pl.program_id(1)

    @pl.when(k == 0)
    def _init():
        acc_ref[...] = jnp.zeros_like(acc_ref)

    h = jnp.dot(x_ref[...], w1_ref[...],
                preferred_element_type=jnp.float32) + b1_ref[...]
    h = jnp.maximum(h, 0.0)
    acc_ref[...] += jnp.dot(h.astype(w2_ref.dtype), w2_ref[...],
                            preferred_element_type=jnp.float32)

    @pl.when(k == pl.num_programs(1) - 1)
    def _finalize():
        # TODO(synk): training-mode Dropout not implemented (eval = identity).
        o_ref[...] = (acc_ref[...] + b2_ref[...]).astype(o_ref.dtype)


@functools.partial(jax.jit, static_argnames=("tile_m", "tile_h", "force_chunked"))
def feed_forward(x, w1, b1, w2, b2, tile_m=None, tile_h=2048, force_chunked=False):
    """x: (B, T, E). w1: (E, 4E), b1: (4E,), w2: (4E, E), b2: (E,).
    Returns (B, T, E) in x.dtype (eval-mode dropout = identity)."""
    B, T, E = x.shape
    H = w1.shape[1]                       # 4 * E
    M = B * T
    out_itemsize = jnp.dtype(x.dtype).itemsize

    # --- generation-aware VMEM budget (v7x: 64 MiB, v5e/v6e: 128 MiB) -------
    vmem_cap = _device_vmem_bytes()
    vmem_budget = int(0.75 * vmem_cap)    # headroom for compiler internals

    # --- row tile (larger on 128 MiB parts, split for megacore) -------------
    tm_target = tile_m if tile_m is not None else (
        1024 if vmem_cap >= 96 * 2**20 else 512)
    tm = _select_tm(M, tm_target)
    M_pad = _round_up(M, tm)

    # --- dtype / layout prep (bf16 operands for the MXU, f32 accumulate) ----
    x2d = x.reshape(M, E).astype(jnp.bfloat16)
    if M_pad != M:
        x2d = jnp.pad(x2d, ((0, M_pad - M), (0, 0)))
    w1b = w1.astype(jnp.bfloat16)
    w2b = w2.astype(jnp.bfloat16)
    b1_2d = b1.reshape(1, H).astype(jnp.float32)
    b2_2d = b2.reshape(1, E).astype(jnp.float32)

    resident_est = _resident_vmem_bytes(E, H, tm, out_itemsize)
    if not force_chunked and resident_est <= vmem_budget:
        # ================= FAST PATH: weights resident in VMEM ==============
        grid = (M_pad // tm,)
        vmem_limit = int(min(max(2 * resident_est, 32 * 2**20), vmem_budget))
        cost = pl.CostEstimate(
            flops=4 * M_pad * E * H,
            transcendentals=0,
            bytes_accessed=(M_pad * E * 2 + 2 * E * H * 2 + H * 4 + E * 4
                            + M_pad * E * out_itemsize))
        out = pl.pallas_call(
            ffn_kernel_resident,
            out_shape=jax.ShapeDtypeStruct((M_pad, E), x.dtype),
            grid_spec=pltpu.PrefetchScalarGridSpec(
                num_scalar_prefetch=0,
                grid=grid,
                in_specs=[
                    pl.BlockSpec((tm, E), lambda i: (i, 0)),   # x rows
                    pl.BlockSpec((E, H), lambda i: (0, 0)),    # W1 (resident)
                    pl.BlockSpec((1, H), lambda i: (0, 0)),    # b1
                    pl.BlockSpec((H, E), lambda i: (0, 0)),    # W2 (resident)
                    pl.BlockSpec((1, E), lambda i: (0, 0)),    # b2
                ],
                out_specs=pl.BlockSpec((tm, E), lambda i: (i, 0)),
            ),
            compiler_params=pltpu.CompilerParams(
                dimension_semantics=("parallel",),
                vmem_limit_bytes=vmem_limit),
            cost_estimate=cost,
        )(x2d, w1b, b1_2d, w2b, b2_2d)
        return out[:M].reshape(B, T, E)

    # ============ CHUNKED PATH: stream hidden dim, f32 accumulator ==========
    th = _select_th(E, H, tm, out_itemsize, vmem_budget, tile_h)
    H_pad = _round_up(H, th)
    if H_pad != H:
        # Zero-padded hidden columns contribute exactly 0 to the output.
        w1b = jnp.pad(w1b, ((0, 0), (0, H_pad - H)))
        b1_2d = jnp.pad(b1_2d, ((0, 0), (0, H_pad - H)))
        w2b = jnp.pad(w2b, ((0, H_pad - H), (0, 0)))

    grid = (M_pad // tm, H_pad // th)
    chunk_est = _chunked_vmem_bytes(E, tm, th, out_itemsize)
    vmem_limit = int(min(max(2 * chunk_est, 32 * 2**20), vmem_budget))
    cost = pl.CostEstimate(
        flops=4 * M_pad * E * H_pad,
        transcendentals=0,
        bytes_accessed=(M_pad * E * 2
                        + grid[0] * (2 * E * H_pad * 2 + H_pad * 4 + E * 4)
                        + M_pad * E * out_itemsize))

    out = pl.pallas_call(
        ffn_kernel_chunked,
        out_shape=jax.ShapeDtypeStruct((M_pad, E), x.dtype),
        grid_spec=pltpu.PrefetchScalarGridSpec(
            num_scalar_prefetch=0,
            grid=grid,
            in_specs=[
                pl.BlockSpec((tm, E), lambda i, k: (i, 0)),   # x rows
                pl.BlockSpec((E, th), lambda i, k: (0, k)),   # W1 chunk
                pl.BlockSpec((1, th), lambda i, k: (0, k)),   # b1 chunk
                pl.BlockSpec((th, E), lambda i, k: (k, 0)),   # W2 chunk
                pl.BlockSpec((1, E), lambda i, k: (0, 0)),    # b2
            ],
            out_specs=pl.BlockSpec((tm, E), lambda i, k: (i, 0)),
            scratch_shapes=[pltpu.VMEM((tm, E), jnp.float32)],
        ),
        compiler_params=pltpu.CompilerParams(
            dimension_semantics=("parallel", "arbitrary"),
            vmem_limit_bytes=vmem_limit),
        cost_estimate=cost,
    )(x2d, w1b, b1_2d, w2b, b2_2d)
    return out[:M].reshape(B, T, E)


def init_params(key, emb_dim):
    """Deterministic init mimicking nn.Linear (uniform +-1/sqrt(fan_in))."""
    hidden = 4 * emb_dim
    k1, k2, k3, k4 = jax.random.split(key, 4)
    bound1 = 1.0 / jnp.sqrt(emb_dim)
    bound2 = 1.0 / jnp.sqrt(hidden)
    w1 = jax.random.uniform(k1, (emb_dim, hidden), jnp.float32, -bound1, bound1)
    b1 = jax.random.uniform(k2, (hidden,), jnp.float32, -bound1, bound1)
    w2 = jax.random.uniform(k3, (hidden, emb_dim), jnp.float32, -bound2, bound2)
    b2 = jax.random.uniform(k4, (emb_dim,), jnp.float32, -bound2, bound2)
    return w1, b1, w2, b2


if __name__ == "__main__":
    key = jax.random.PRNGKey(0)
    B, T, E = 2, 8, 128          # batch, seq, emb_dim (lane-dense) -> hidden 512
    kx, kp = jax.random.split(key)
    x = jax.random.normal(kx, (B, T, E), dtype=jnp.float32)
    w1, b1, w2, b2 = init_params(kp, E)

    # bf16-matched pure-JAX reference (same casts as the kernel performs).
    x2d = x.reshape(-1, E)
    xb = x2d.astype(jnp.bfloat16).astype(jnp.float32)
    w1f = w1.astype(jnp.bfloat16).astype(jnp.float32)
    w2f = w2.astype(jnp.bfloat16).astype(jnp.float32)
    h = jnp.maximum(xb @ w1f + b1, 0.0)
    ref = (h.astype(jnp.bfloat16).astype(jnp.float32) @ w2f + b2).reshape(B, T, E)
    ref32 = (jnp.maximum(x2d @ w1 + b1, 0.0) @ w2 + b2).reshape(B, T, E)

    # 1) Weights-resident fast path (default for this size).
    out = jax.block_until_ready(feed_forward(x, w1, b1, w2, b2))
    assert out.shape == (B, T, E)
    assert out.dtype == x.dtype
    assert jnp.allclose(out, ref, atol=1e-2, rtol=1e-2), \
        float(jnp.max(jnp.abs(out - ref)))
    assert jnp.allclose(out, ref32, atol=5e-2, rtol=5e-2)

    # 2) Chunked path, exercising hidden-dim padding (H=512 -> H_pad=768).
    out_c = jax.block_until_ready(
        feed_forward(x, w1, b1, w2, b2, tile_h=384, force_chunked=True))
    assert jnp.allclose(out_c, ref, atol=1e-2, rtol=1e-2), \
        float(jnp.max(jnp.abs(out_c - ref)))
    assert jnp.allclose(out_c, ref32, atol=5e-2, rtol=5e-2)

    print("KERNEL_OK")
</pallas_src>

<mosaic_0001>
module attributes {stable_mosaic.version = 11 : i64} {
  func.func @ffn_kernel_resident(%arg0: i32, %arg1: memref<16x128xbf16, #tpu.memory_space<vmem>>, %arg2: memref<128x512xbf16, #tpu.memory_space<vmem>>, %arg3: memref<1x512xf32, #tpu.memory_space<vmem>>, %arg4: memref<512x128xbf16, #tpu.memory_space<vmem>>, %arg5: memref<1x128xf32, #tpu.memory_space<vmem>>, %arg6: memref<16x128xf32, #tpu.memory_space<vmem>>) attributes {dimension_semantics = [#tpu.dimension_semantics<parallel>], iteration_bounds = array<i64: 1>, scalar_prefetch = 0 : i64, scratch_operands = 0 : i64, tpu.core_type = #tpu.core_type<tc>, window_params = [{transform_indices = @transform_0, window_bounds = array<i64: 16, 128>}, {pipeline_mode = #tpu.pipeline_mode<synchronous>, transform_indices = @transform_1, window_bounds = array<i64: 128, 512>}, {pipeline_mode = #tpu.pipeline_mode<synchronous>, transform_indices = @transform_2, window_bounds = array<i64: 1, 512>}, {pipeline_mode = #tpu.pipeline_mode<synchronous>, transform_indices = @transform_3, window_bounds = array<i64: 512, 128>}, {pipeline_mode = #tpu.pipeline_mode<synchronous>, transform_indices = @transform_4, window_bounds = array<i64: 1, 128>}, {transform_indices = @transform_5, window_bounds = array<i64: 16, 128>}]} {
    %c0 = arith.constant 0 : index
    %c0_0 = arith.constant 0 : index
    %0 = vector.load %arg1[%c0, %c0_0] : memref<16x128xbf16, #tpu.memory_space<vmem>>, vector<16x128xbf16>
    %c0_1 = arith.constant 0 : index
    %c0_2 = arith.constant 0 : index
    %1 = vector.load %arg2[%c0_1, %c0_2] : memref<128x512xbf16, #tpu.memory_space<vmem>>, vector<128x512xbf16>
    %cst = arith.constant dense<0.000000e+00> : vector<16x512xf32>
    %2 = tpu.matmul %0, %1, %cst {dimension_numbers = #tpu.dot_dimension_numbers<[1], [0], [0], [1], [0, 0, 1, 1], [], []>} : vector<16x128xbf16>, vector<128x512xbf16>, vector<16x512xf32> -> vector<16x512xf32>
    %c0_3 = arith.constant 0 : index
    %c0_4 = arith.constant 0 : index
    %3 = vector.load %arg3[%c0_3, %c0_4] : memref<1x512xf32, #tpu.memory_space<vmem>>, vector<1x512xf32>
    %4 = vector.broadcast %3 : vector<1x512xf32> to vector<16x512xf32>
    %5 = arith.addf %2, %4 : vector<16x512xf32>
    %cst_5 = arith.constant 0.000000e+00 : f32
    %6 = vector.broadcast %cst_5 : f32 to vector<16x512xf32>
    %7 = arith.maximumf %5, %6 : vector<16x512xf32>
    %8 = arith.truncf %7 : vector<16x512xf32> to vector<16x512xbf16>
    %c0_6 = arith.constant 0 : index
    %c0_7 = arith.constant 0 : index
    %9 = vector.load %arg4[%c0_6, %c0_7] : memref<512x128xbf16, #tpu.memory_space<vmem>>, vector<512x128xbf16>
    %cst_8 = arith.constant dense<0.000000e+00> : vector<16x128xf32>
    %10 = tpu.matmul %8, %9, %cst_8 {dimension_numbers = #tpu.dot_dimension_numbers<[1], [0], [0], [1], [0, 0, 1, 1], [], []>} : vector<16x512xbf16>, vector<512x128xbf16>, vector<16x128xf32> -> vector<16x128xf32>
    %c0_9 = arith.constant 0 : index
    %c0_10 = arith.constant 0 : index
    %11 = vector.load %arg5[%c0_9, %c0_10] : memref<1x128xf32, #tpu.memory_space<vmem>>, vector<1x128xf32>
    %12 = vector.broadcast %11 : vector<1x128xf32> to vector<16x128xf32>
    %13 = arith.addf %10, %12 : vector<16x128xf32>
    %c0_11 = arith.constant 0 : index
    %c0_12 = arith.constant 0 : index
    %14 = vector.load %arg6[%c0_11, %c0_12] : memref<16x128xf32, #tpu.memory_space<vmem>>, vector<16x128xf32>
    tpu.vector_store %arg6[%c0_11, %c0_12], %13 {strides = array<i32>} : memref<16x128xf32, #tpu.memory_space<vmem>>, vector<16x128xf32>,
    return
  }
  func.func @transform_0(%arg0: i32) -> (i32, i32) {
    %c0_i32 = arith.constant 0 : i32
    %c0_i32_0 = arith.constant 0 : i32
    return %arg0, %c0_i32 : i32, i32
  }
  func.func @transform_1(%arg0: i32) -> (i32, i32) {
    %c0_i32 = arith.constant 0 : i32
    %c0_i32_0 = arith.constant 0 : i32
    %c0_i32_1 = arith.constant 0 : i32
    return %c0_i32, %c0_i32_0 : i32, i32
  }
  func.func @transform_2(%arg0: i32) -> (i32, i32) {
    %c0_i32 = arith.constant 0 : i32
    %c0_i32_0 = arith.constant 0 : i32
    %c0_i32_1 = arith.constant 0 : i32
    return %c0_i32, %c0_i32_0 : i32, i32
  }
  func.func @transform_3(%arg0: i32) -> (i32, i32) {
    %c0_i32 = arith.constant 0 : i32
    %c0_i32_0 = arith.constant 0 : i32
    %c0_i32_1 = arith.constant 0 : i32
    return %c0_i32, %c0_i32_0 : i32, i32
  }
  func.func @transform_4(%arg0: i32) -> (i32, i32) {
    %c0_i32 = arith.constant 0 : i32
    %c0_i32_0 = arith.constant 0 : i32
    %c0_i32_1 = arith.constant 0 : i32
    return %c0_i32, %c0_i32_0 : i32, i32
  }
  func.func @transform_5(%arg0: i32) -> (i32, i32) {
    %c0_i32 = arith.constant 0 : i32
    %c0_i32_0 = arith.constant 0 : i32
    return %arg0, %c0_i32 : i32, i32
  }
}

</mosaic_0001>

<llo_original>
// kernel: feed_forward.1
$region0: #{feed_forward.1}
  #allocation0 [shape = 'u32[]', space=smem, size = 0x4, offset = 0x4, fixed_abs, tag = 'smem constant byte address 0x4 - core index']
  #allocation1 [shape = 'u32[144,128]{1,0:T(1,128)}', space=vmem, size = 0x12000, scoped, tag = 'internal scratch']
  %s0 = inlined_call_operand.vmem [shape: bf16[16,128], index: 0, kind: input, shape index: {}]
  %s1 = inlined_call_operand.vmem [shape: bf16[128,512], index: 1, kind: input, shape index: {}]
  %s2 = inlined_call_operand.vmem [shape: f32[1,512], index: 2, kind: input, shape index: {}]
  %s3 = inlined_call_operand.vmem [shape: bf16[512,128], index: 3, kind: input, shape index: {}]
  %s4 = inlined_call_operand.vmem [shape: f32[1,128], index: 4, kind: input, shape index: {}]
  %s5 = inlined_call_operand.hbm [shape: f32[16,128], index: 5, kind: output, shape index: {}]
  %s6 = sld [smem:[#allocation0]]
  $region30: #{feed_forward.1} parent=0
    _
  %s8 = ssub.s32 1, %s6
  %s9 = scalar_select 0, %s8, %s6
  $region1: #{feed_forward.1} parent=0
    #allocation2 [shape = 'u8[8192]{0}', space=vmem, size = 0x2000, scoped, tag = 'output window, operand 0, single buffered']
    #allocation3 [shape = 's32[1]{0}', space=sflag, size = 0x4, scoped, tag = 'scoped memory for feed_forward.1']
    %10 = vsyncpa [#allocation3], 0
    // Predicated region
    $region2: #{feed_forward.1} parent=1 // pred_check
      _
    $region3: #{feed_forward.1} parent=1 // pred_check_branch
      %12 = sbr.rel (0) target = $region5
    $region4: #{feed_forward.1} parent=1 // pred_region
      _
    $region5: #{feed_forward.1} parent=1 // pred_fallthru
      _
    // Predicated region
    $region6: #{feed_forward.1} parent=1 // pred_check
      _
    $region7: #{feed_forward.1} parent=1 // pred_check_branch
      %14 = sbr.rel (0) target = $region9
    $region8: #{feed_forward.1} parent=1 // pred_region
      _
    $region9: #{feed_forward.1} parent=1 // pred_fallthru
      _
    // Predicated region
    $region10: #{feed_forward.1} parent=1 // pred_check
      _
    $region11: #{feed_forward.1} parent=1 // pred_check_branch
      %16 = sbr.rel (0) target = $region13
    $region12: #{feed_forward.1} parent=1 // pred_region
      _
    $region13: #{feed_forward.1} parent=1 // pred_fallthru
      _
    // Predicated region
    $region14: #{feed_forward.1} parent=1 // pred_check
      _
    $region15: #{feed_forward.1} parent=1 // pred_check_branch
      %18 = sbr.rel (0) target = $region17
    $region16: #{feed_forward.1} parent=1 // pred_region
      _
    $region17: #{feed_forward.1} parent=1 // pred_fallthru
      _
    // Predicated region
    $region18: #{feed_forward.1} parent=1 // pred_check
      _
    $region19: #{feed_forward.1} parent=1 // pred_check_branch
      %20 = sbr.rel (0) target = $region21
    $region20: #{feed_forward.1} parent=1 // pred_region
      _
    $region21: #{feed_forward.1} parent=1 // pred_fallthru
      _
    %v22 = vld [vmem:[%s0] sm:$0xf]
    %v23 = vld [vmem:[%s0 + $0x4] sm:$0xf]
    %v24 = vld [vmem:[%s1] sm:$0xff]
    %v25 = vld [vmem:[%s1 + $0x8] sm:$0xff]
    %v26 = vld [vmem:[%s1 + $0x10] sm:$0xff]
    %v27 = vld [vmem:[%s1 + $0x18] sm:$0xff]
    %v28 = vld [vmem:[%s1 + $0x20] sm:$0xff]
    %v29 = vld [vmem:[%s1 + $0x28] sm:$0xff]
    %v30 = vld [vmem:[%s1 + $0x30] sm:$0xff]
    %v31 = vld [vmem:[%s1 + $0x38] sm:$0xff]
    %v32 = vld [vmem:[%s1 + $0x40] sm:$0xff]
    %v33 = vld [vmem:[%s1 + $0x48] sm:$0xff]
    %v34 = vld [vmem:[%s1 + $0x50] sm:$0xff]
    %v35 = vld [vmem:[%s1 + $0x58] sm:$0xff]
    %v36 = vld [vmem:[%s1 + $0x60] sm:$0xff]
    %v37 = vld [vmem:[%s1 + $0x68] sm:$0xff]
    %v38 = vld [vmem:[%s1 + $0x70] sm:$0xff]
    %v39 = vld [vmem:[%s1 + $0x78] sm:$0xff]
    %v40 = vld [vmem:[%s1 + $0x80] sm:$0xff]
    %v41 = vld [vmem:[%s1 + $0x88] sm:$0xff]
    %v42 = vld [vmem:[%s1 + $0x90] sm:$0xff]
    %v43 = vld [vmem:[%s1 + $0x98] sm:$0xff]
    %v44 = vld [vmem:[%s1 + $0xa0] sm:$0xff]
    %v45 = vld [vmem:[%s1 + $0xa8] sm:$0xff]
    %v46 = vld [vmem:[%s1 + $0xb0] sm:$0xff]
    %v47 = vld [vmem:[%s1 + $0xb8] sm:$0xff]
    %v48 = vld [vmem:[%s1 + $0xc0] sm:$0xff]
    %v49 = vld [vmem:[%s1 + $0xc8] sm:$0xff]
    %v50 = vld [vmem:[%s1 + $0xd0] sm:$0xff]
    %v51 = vld [vmem:[%s1 + $0xd8] sm:$0xff]
    %v52 = vld [vmem:[%s1 + $0xe0] sm:$0xff]
    %v53 = vld [vmem:[%s1 + $0xe8] sm:$0xff]
    %v54 = vld [vmem:[%s1 + $0xf0] sm:$0xff]
    %v55 = vld [vmem:[%s1 + $0xf8] sm:$0xff]
    %v56 = vld [vmem:[%s2] sm:$0xf]
    %v58 = vlaneseq
    %v59 = vshrl.u32 %v58, 7
    %v60 = vsub.s32 0, %v59
    %v61 = vrot.slane %v56, %v60
    %v62 = vlaneseq
    %v63 = vshrl.u32 %v62, 7
    %v64 = vsub.s32 1, %v63
    %v65 = vrot.slane %v56, %v64
    %v66 = vlaneseq
    %v67 = vshrl.u32 %v66, 7
    %v68 = vsub.s32 2, %v67
    %v69 = vrot.slane %v56, %v68
    %v70 = vlaneseq
    %v71 = vshrl.u32 %v70, 7
    %v72 = vsub.s32 3, %v71
    %v73 = vrot.slane %v56, %v72
    %v80 = vunpack.c.l.b16 %v22
    %v81 = vunpack.c.l.b16 %v23
    %v82 = vpack.c.b16 %v81, %v80
    %v116 = vunpack.c.l.b16 %v24
    %v117 = vunpack.c.h.b16 %v24
    %v118 = vunpack.c.l.b16 %v25
    %v119 = vunpack.c.h.b16 %v25
    %v120 = vunpack.c.l.b16 %v26
    %v121 = vunpack.c.h.b16 %v26
    %v122 = vunpack.c.l.b16 %v27
    %v123 = vunpack.c.h.b16 %v27
    %v124 = vunpack.c.l.b16 %v28
    %v125 = vunpack.c.h.b16 %v28
    %v126 = vunpack.c.l.b16 %v29
    %v127 = vunpack.c.h.b16 %v29
    %v128 = vunpack.c.l.b16 %v30
    %v129 = vunpack.c.h.b16 %v30
    %v130 = vunpack.c.l.b16 %v31
    %v131 = vunpack.c.h.b16 %v31
    %v132 = vunpack.c.l.b16 %v32
    %v133 = vunpack.c.h.b16 %v32
    %v134 = vunpack.c.l.b16 %v33
    %v135 = vunpack.c.h.b16 %v33
    %v136 = vunpack.c.l.b16 %v34
    %v137 = vunpack.c.h.b16 %v34
    %v138 = vunpack.c.l.b16 %v35
    %v139 = vunpack.c.h.b16 %v35
    %v140 = vunpack.c.l.b16 %v36
    %v141 = vunpack.c.h.b16 %v36
    %v142 = vunpack.c.l.b16 %v37
    %v143 = vunpack.c.h.b16 %v37
    %v144 = vunpack.c.l.b16 %v38
    %v145 = vunpack.c.h.b16 %v38
    %v146 = vunpack.c.l.b16 %v39
    %v147 = vunpack.c.h.b16 %v39
    %v148 = vunpack.c.l.b16 %v40
    %v149 = vunpack.c.h.b16 %v40
    %v150 = vunpack.c.l.b16 %v41
    %v151 = vunpack.c.h.b16 %v41
    %v152 = vunpack.c.l.b16 %v42
    %v153 = vunpack.c.h.b16 %v42
    %v154 = vunpack.c.l.b16 %v43
    %v155 = vunpack.c.h.b16 %v43
    %v156 = vunpack.c.l.b16 %v44
    %v157 = vunpack.c.h.b16 %v44
    %v158 = vunpack.c.l.b16 %v45
    %v159 = vunpack.c.h.b16 %v45
    %v160 = vunpack.c.l.b16 %v46
    %v161 = vunpack.c.h.b16 %v46
    %v162 = vunpack.c.l.b16 %v47
    %v163 = vunpack.c.h.b16 %v47
    %v164 = vunpack.c.l.b16 %v48
    %v165 = vunpack.c.h.b16 %v48
    %v166 = vunpack.c.l.b16 %v49
    %v167 = vunpack.c.h.b16 %v49
    %v168 = vunpack.c.l.b16 %v50
    %v169 = vunpack.c.h.b16 %v50
    %v170 = vunpack.c.l.b16 %v51
    %v171 = vunpack.c.h.b16 %v51
    %v172 = vunpack.c.l.b16 %v52
    %v173 = vunpack.c.h.b16 %v52
    %v174 = vunpack.c.l.b16 %v53
    %v175 = vunpack.c.h.b16 %v53
    %v176 = vunpack.c.l.b16 %v54
    %v177 = vunpack.c.h.b16 %v54
    %v178 = vunpack.c.l.b16 %v55
    %v179 = vunpack.c.h.b16 %v55
    %v180 = vpack.c.b16 %v120, %v116
    %v181 = vpack.c.b16 %v121, %v117
    %v182 = vpack.c.b16 %v122, %v118
    %v183 = vpack.c.b16 %v123, %v119
    %v184 = vpack.c.b16 %v128, %v124
    %v185 = vpack.c.b16 %v129, %v125
    %v186 = vpack.c.b16 %v130, %v126
    %v187 = vpack.c.b16 %v131, %v127
    %v188 = vpack.c.b16 %v136, %v132
    %v189 = vpack.c.b16 %v137, %v133
    %v190 = vpack.c.b16 %v138, %v134
    %v191 = vpack.c.b16 %v139, %v135
    %v192 = vpack.c.b16 %v144, %v140
    %v193 = vpack.c.b16 %v145, %v141
    %v194 = vpack.c.b16 %v146, %v142
    %v195 = vpack.c.b16 %v147, %v143
    %v196 = vpack.c.b16 %v152, %v148
    %v197 = vpack.c.b16 %v153, %v149
    %v198 = vpack.c.b16 %v154, %v150
    %v199 = vpack.c.b16 %v155, %v151
    %v200 = vpack.c.b16 %v160, %v156
    %v201 = vpack.c.b16 %v161, %v157
    %v202 = vpack.c.b16 %v162, %v158
    %v203 = vpack.c.b16 %v163, %v159
    %v204 = vpack.c.b16 %v168, %v164
    %v205 = vpack.c.b16 %v169, %v165
    %v206 = vpack.c.b16 %v170, %v166
    %v207 = vpack.c.b16 %v171, %v167
    %v208 = vpack.c.b16 %v176, %v172
    %v209 = vpack.c.b16 %v177, %v173
    %v210 = vpack.c.b16 %v178, %v174
    %v211 = vpack.c.b16 %v179, %v175
    %244 = vmatprep.subr.bf16.mxu0 %v181
    %245 = vmatpush1.bf16.msra.mxu0 %v180
    %246 = vmatprep.subr.bf16.mxu0 %v185
    %247 = vmatpush1.bf16.msra.mxu0 %v184
    %248 = vmatprep.subr.bf16.mxu0 %v189
    %249 = vmatpush1.bf16.msra.mxu0 %v188
    %250 = vmatprep.subr.bf16.mxu0 %v193
    %251 = vmatpush1.bf16.msra.mxu0 %v192
    %252 = vmatprep.subr.bf16.mxu0 %v197
    %253 = vmatpush1.bf16.msra.mxu0 %v196
    %254 = vmatprep.subr.bf16.mxu0 %v201
    %255 = vmatpush1.bf16.msra.mxu0 %v200
    %256 = vmatprep.subr.bf16.mxu0 %v205
    %257 = vmatpush1.bf16.msra.mxu0 %v204
    %258 = vmatprep.subr.bf16.mxu0 %v209
    %259 = vmatpush1.bf16.msra.mxu0 %v208
    %260 = vmatprep.subr.bf16.mxu0 0
    %261 = vmatpush1.bf16.msra.mxu0 0
    %262 = vmatprep.subr.bf16.mxu0 0
    %263 = vmatpush1.bf16.msra.mxu0 0
    %264 = vmatprep.subr.bf16.mxu0 0
    %265 = vmatpush1.bf16.msra.mxu0 0
    %266 = vmatprep.subr.bf16.mxu0 0
    %267 = vmatpush1.bf16.msra.mxu0 0
    %268 = vmatprep.subr.bf16.mxu0 0
    %269 = vmatpush1.bf16.msra.mxu0 0
    %270 = vmatprep.subr.bf16.mxu0 0
    %271 = vmatpush1.bf16.msra.mxu0 0
    %272 = vmatprep.subr.bf16.mxu0 0
    %273 = vmatpush1.bf16.msra.mxu0 0
    %274 = vmatprep.subr.bf16.mxu0 0
    %275 = vmatpush1.bf16.msra.mxu0 0
    %276 = vmatprep.mubr.bf16.mxu0 0
    %277 = vmatmul.mubr.bf16.gmra.mrb[0].mxu0 %v82
    %v278 = vpop.f32.mrb[0].mxu0
    %v279 = vadd.f32 %v61, %v278
    %v280 = vpop.f32.mrb[0].mxu0
    %v281 = vadd.f32 %v65, %v280
    %v282 = vpop.f32.mrb[0].mxu0
    %v283 = vadd.f32 %v61, %v282
    %v284 = vpop.f32.mrb[0].mxu0
    %v285 = vadd.f32 %v65, %v284
    %286 = vdwg.mxu0
    %287 = vmatprep.subr.bf16.mxu0 %v183
    %288 = vmatpush1.bf16.msra.mxu0 %v182
    %289 = vmatprep.subr.bf16.mxu0 %v187
    %290 = vmatpush1.bf16.msra.mxu0 %v186
    %291 = vmatprep.subr.bf16.mxu0 %v191
    %292 = vmatpush1.bf16.msra.mxu0 %v190
    %293 = vmatprep.subr.bf16.mxu0 %v195
    %294 = vmatpush1.bf16.msra.mxu0 %v194
    %295 = vmatprep.subr.bf16.mxu0 %v199
    %296 = vmatpush1.bf16.msra.mxu0 %v198
    %297 = vmatprep.subr.bf16.mxu0 %v203
    %298 = vmatpush1.bf16.msra.mxu0 %v202
    %299 = vmatprep.subr.bf16.mxu0 %v207
    %300 = vmatpush1.bf16.msra.mxu0 %v206
    %301 = vmatprep.subr.bf16.mxu0 %v211
    %302 = vmatpush1.bf16.msra.mxu0 %v210
    %303 = vmatprep.subr.bf16.mxu0 0
    %304 = vmatpush1.bf16.msra.mxu0 0
    %305 = vmatprep.subr.bf16.mxu0 0
    %306 = vmatpush1.bf16.msra.mxu0 0
    %307 = vmatprep.subr.bf16.mxu0 0
    %308 = vmatpush1.bf16.msra.mxu0 0
    %309 = vmatprep.subr.bf16.mxu0 0
    %310 = vmatpush1.bf16.msra.mxu0 0
    %311 = vmatprep.subr.bf16.mxu0 0
    %312 = vmatpush1.bf16.msra.mxu0 0
    %313 = vmatprep.subr.bf16.mxu0 0
    %314 = vmatpush1.bf16.msra.mxu0 0
    %315 = vmatprep.subr.bf16.mxu0 0
    %316 = vmatpush1.bf16.msra.mxu0 0
    %317 = vmatprep.subr.bf16.mxu0 0
    %318 = vmatpush1.bf16.msra.mxu0 0
    %319 = vmatprep.mubr.bf16.mxu0 0
    %320 = vmatmul.mubr.bf16.gmra.mrb[0].mxu0 %v82
    %v321 = vpop.f32.mrb[0].mxu0
    %v322 = vadd.f32 %v69, %v321
    %v323 = vpop.f32.mrb[0].mxu0
    %v324 = vadd.f32 %v73, %v323
    %v325 = vpop.f32.mrb[0].mxu0
    %v326 = vadd.f32 %v69, %v325
    %v327 = vpop.f32.mrb[0].mxu0
    %v328 = vadd.f32 %v73, %v327
    %329 = vdwg.mxu0
    %v330 = vmax.f32 %v279, 0.0
    %v331 = vmax.f32 %v281, 0.0
    %v332 = vmax.f32 %v322, 0.0
    %v333 = vmax.f32 %v324, 0.0
    %v334 = vmax.f32 %v283, 0.0
    %v335 = vmax.f32 %v285, 0.0
    %v336 = vmax.f32 %v326, 0.0
    %v337 = vmax.f32 %v328, 0.0
    %v338 = vpack.c.bf16 %v334, %v330
    %v339 = vpack.c.bf16 %v335, %v331
    %v340 = vpack.c.bf16 %v336, %v332
    %v341 = vpack.c.bf16 %v337, %v333
    %v342 = vld [vmem:[%s3] sm:$0xf]
    %v343 = vld [vmem:[%s3 + $0x4] sm:$0xf]
    %v344 = vld [vmem:[%s3 + $0x8] sm:$0xf]
    %v345 = vld [vmem:[%s3 + $0xc] sm:$0xf]
    %v346 = vld [vmem:[%s3 + $0x10] sm:$0xf]
    %v347 = vld [vmem:[%s3 + $0x14] sm:$0xf]
    %v348 = vld [vmem:[%s3 + $0x18] sm:$0xf]
    %v349 = vld [vmem:[%s3 + $0x1c] sm:$0xf]
    %v350 = vld [vmem:[%s3 + $0x20] sm:$0xf]
    %v351 = vld [vmem:[%s3 + $0x24] sm:$0xf]
    %v352 = vld [vmem:[%s3 + $0x28] sm:$0xf]
    %v353 = vld [vmem:[%s3 + $0x2c] sm:$0xf]
    %v354 = vld [vmem:[%s3 + $0x30] sm:$0xf]
    %v355 = vld [vmem:[%s3 + $0x34] sm:$0xf]
    %v356 = vld [vmem:[%s3 + $0x38] sm:$0xf]
    %v357 = vld [vmem:[%s3 + $0x3c] sm:$0xf]
    %v358 = vld [vmem:[%s3 + $0x40] sm:$0xf]
    %v359 = vld [vmem:[%s3 + $0x44] sm:$0xf]
    %v360 = vld [vmem:[%s3 + $0x48] sm:$0xf]
    %v361 = vld [vmem:[%s3 + $0x4c] sm:$0xf]
    %v362 = vld [vmem:[%s3 + $0x50] sm:$0xf]
    %v363 = vld [vmem:[%s3 + $0x54] sm:$0xf]
    %v364 = vld [vmem:[%s3 + $0x58] sm:$0xf]
    %v365 = vld [vmem:[%s3 + $0x5c] sm:$0xf]
    %v366 = vld [vmem:[%s3 + $0x60] sm:$0xf]
    %v367 = vld [vmem:[%s3 + $0x64] sm:$0xf]
    %v368 = vld [vmem:[%s3 + $0x68] sm:$0xf]
    %v369 = vld [vmem:[%s3 + $0x6c] sm:$0xf]
    %v370 = vld [vmem:[%s3 + $0x70] sm:$0xf]
    %v371 = vld [vmem:[%s3 + $0x74] sm:$0xf]
    %v372 = vld [vmem:[%s3 + $0x78] sm:$0xf]
    %v373 = vld [vmem:[%s3 + $0x7c] sm:$0xf]
    %v374 = vld [vmem:[%s3 + $0x80] sm:$0xf]
    %v375 = vld [vmem:[%s3 + $0x84] sm:$0xf]
    %v376 = vld [vmem:[%s3 + $0x88] sm:$0xf]
    %v377 = vld [vmem:[%s3 + $0x8c] sm:$0xf]
    %v378 = vld [vmem:[%s3 + $0x90] sm:$0xf]
    %v379 = vld [vmem:[%s3 + $0x94] sm:$0xf]
    %v380 = vld [vmem:[%s3 + $0x98] sm:$0xf]
    %v381 = vld [vmem:[%s3 + $0x9c] sm:$0xf]
    %v382 = vld [vmem:[%s3 + $0xa0] sm:$0xf]
    %v383 = vld [vmem:[%s3 + $0xa4] sm:$0xf]
    %v384 = vld [vmem:[%s3 + $0xa8] sm:$0xf]
    %v385 = vld [vmem:[%s3 + $0xac] sm:$0xf]
    %v386 = vld [vmem:[%s3 + $0xb0] sm:$0xf]
    %v387 = vld [vmem:[%s3 + $0xb4] sm:$0xf]
    %v388 = vld [vmem:[%s3 + $0xb8] sm:$0xf]
    %v389 = vld [vmem:[%s3 + $0xbc] sm:$0xf]
    %v390 = vld [vmem:[%s3 + $0xc0] sm:$0xf]
    %v391 = vld [vmem:[%s3 + $0xc4] sm:$0xf]
    %v392 = vld [vmem:[%s3 + $0xc8] sm:$0xf]
    %v393 = vld [vmem:[%s3 + $0xcc] sm:$0xf]
    %v394 = vld [vmem:[%s3 + $0xd0] sm:$0xf]
    %v395 = vld [vmem:[%s3 + $0xd4] sm:$0xf]
    %v396 = vld [vmem:[%s3 + $0xd8] sm:$0xf]
    %v397 = vld [vmem:[%s3 + $0xdc] sm:$0xf]
    %v398 = vld [vmem:[%s3 + $0xe0] sm:$0xf]
    %v399 = vld [vmem:[%s3 + $0xe4] sm:$0xf]
    %v400 = vld [vmem:[%s3 + $0xe8] sm:$0xf]
    %v401 = vld [vmem:[%s3 + $0xec] sm:$0xf]
    %v402 = vld [vmem:[%s3 + $0xf0] sm:$0xf]
    %v403 = vld [vmem:[%s3 + $0xf4] sm:$0xf]
    %v404 = vld [vmem:[%s3 + $0xf8] sm:$0xf]
    %v405 = vld [vmem:[%s3 + $0xfc] sm:$0xf]
    %v406 = vld [vmem:[%s4] sm:$0x1]
    %v408 = vlaneseq
    %v409 = vshrl.u32 %v408, 7
    %v410 = vsub.s32 0, %v409
    %v411 = vrot.slane %v406, %v410
    %v477 = vunpack.c.l.b16 %v342
    %v478 = vunpack.c.l.b16 %v343
    %v479 = vunpack.c.l.b16 %v344
    %v480 = vunpack.c.l.b16 %v345
    %v481 = vunpack.c.l.b16 %v346
    %v482 = vunpack.c.l.b16 %v347
    %v483 = vunpack.c.l.b16 %v348
    %v484 = vunpack.c.l.b16 %v349
    %v485 = vunpack.c.l.b16 %v350
    %v486 = vunpack.c.l.b16 %v351
    %v487 = vunpack.c.l.b16 %v352
    %v488 = vunpack.c.l.b16 %v353
    %v489 = vunpack.c.l.b16 %v354
    %v490 = vunpack.c.l.b16 %v355
    %v491 = vunpack.c.l.b16 %v356
    %v492 = vunpack.c.l.b16 %v357
    %v493 = vunpack.c.l.b16 %v358
    %v494 = vunpack.c.l.b16 %v359
    %v495 = vunpack.c.l.b16 %v360
    %v496 = vunpack.c.l.b16 %v361
    %v497 = vunpack.c.l.b16 %v362
    %v498 = vunpack.c.l.b16 %v363
    %v499 = vunpack.c.l.b16 %v364
    %v500 = vunpack.c.l.b16 %v365
    %v501 = vunpack.c.l.b16 %v366
    %v502 = vunpack.c.l.b16 %v367
    %v503 = vunpack.c.l.b16 %v368
    %v504 = vunpack.c.l.b16 %v369
    %v505 = vunpack.c.l.b16 %v370
    %v506 = vunpack.c.l.b16 %v371
    %v507 = vunpack.c.l.b16 %v372
    %v508 = vunpack.c.l.b16 %v373
    %v509 = vunpack.c.l.b16 %v374
    %v510 = vunpack.c.l.b16 %v375
    %v511 = vunpack.c.l.b16 %v376
    %v512 = vunpack.c.l.b16 %v377
    %v513 = vunpack.c.l.b16 %v378
    %v514 = vunpack.c.l.b16 %v379
    %v515 = vunpack.c.l.b16 %v380
    %v516 = vunpack.c.l.b16 %v381
    %v517 = vunpack.c.l.b16 %v382
    %v518 = vunpack.c.l.b16 %v383
    %v519 = vunpack.c.l.b16 %v384
    %v520 = vunpack.c.l.b16 %v385
    %v521 = vunpack.c.l.b16 %v386
    %v522 = vunpack.c.l.b16 %v387
    %v523 = vunpack.c.l.b16 %v388
    %v524 = vunpack.c.l.b16 %v389
    %v525 = vunpack.c.l.b16 %v390
    %v526 = vunpack.c.l.b16 %v391
    %v527 = vunpack.c.l.b16 %v392
    %v528 = vunpack.c.l.b16 %v393
    %v529 = vunpack.c.l.b16 %v394
    %v530 = vunpack.c.l.b16 %v395
    %v531 = vunpack.c.l.b16 %v396
    %v532 = vunpack.c.l.b16 %v397
    %v533 = vunpack.c.l.b16 %v398
    %v534 = vunpack.c.l.b16 %v399
    %v535 = vunpack.c.l.b16 %v400
    %v536 = vunpack.c.l.b16 %v401
    %v537 = vunpack.c.l.b16 %v402
    %v538 = vunpack.c.l.b16 %v403
    %v539 = vunpack.c.l.b16 %v404
    %v540 = vunpack.c.l.b16 %v405
    %v541 = vpack.c.b16 %v478, %v477
    %v542 = vpack.c.b16 %v480, %v479
    %v543 = vpack.c.b16 %v482, %v481
    %v544 = vpack.c.b16 %v484, %v483
    %v545 = vpack.c.b16 %v486, %v485
    %v546 = vpack.c.b16 %v488, %v487
    %v547 = vpack.c.b16 %v490, %v489
    %v548 = vpack.c.b16 %v492, %v491
    %v549 = vpack.c.b16 %v494, %v493
    %v550 = vpack.c.b16 %v496, %v495
    %v551 = vpack.c.b16 %v498, %v497
    %v552 = vpack.c.b16 %v500, %v499
    %v553 = vpack.c.b16 %v502, %v501
    %v554 = vpack.c.b16 %v504, %v503
    %v555 = vpack.c.b16 %v506, %v505
    %v556 = vpack.c.b16 %v508, %v507
    %v557 = vpack.c.b16 %v510, %v509
    %v558 = vpack.c.b16 %v512, %v511
    %v559 = vpack.c.b16 %v514, %v513
    %v560 = vpack.c.b16 %v516, %v515
    %v561 = vpack.c.b16 %v518, %v517
    %v562 = vpack.c.b16 %v520, %v519
    %v563 = vpack.c.b16 %v522, %v521
    %v564 = vpack.c.b16 %v524, %v523
    %v565 = vpack.c.b16 %v526, %v525
    %v566 = vpack.c.b16 %v528, %v527
    %v567 = vpack.c.b16 %v530, %v529
    %v568 = vpack.c.b16 %v532, %v531
    %v569 = vpack.c.b16 %v534, %v533
    %v570 = vpack.c.b16 %v536, %v535
    %v571 = vpack.c.b16 %v538, %v537
    %v572 = vpack.c.b16 %v540, %v539
    %605 = vmatprep.subr.bf16.mxu0 0
    %606 = vmatpush1.bf16.msra.mxu0 %v541
    %607 = vmatprep.subr.bf16.mxu0 0
    %608 = vmatpush1.bf16.msra.mxu0 %v542
    %609 = vmatprep.subr.bf16.mxu0 0
    %610 = vmatpush1.bf16.msra.mxu0 %v543
    %611 = vmatprep.subr.bf16.mxu0 0
    %612 = vmatpush1.bf16.msra.mxu0 %v544
    %613 = vmatprep.subr.bf16.mxu0 0
    %614 = vmatpush1.bf16.msra.mxu0 %v545
    %615 = vmatprep.subr.bf16.mxu0 0
    %616 = vmatpush1.bf16.msra.mxu0 %v546
    %617 = vmatprep.subr.bf16.mxu0 0
    %618 = vmatpush1.bf16.msra.mxu0 %v547
    %619 = vmatprep.subr.bf16.mxu0 0
    %620 = vmatpush1.bf16.msra.mxu0 %v548
    %621 = vmatprep.subr.bf16.mxu0 0
    %622 = vmatpush1.bf16.msra.mxu0 %v549
    %623 = vmatprep.subr.bf16.mxu0 0
    %624 = vmatpush1.bf16.msra.mxu0 %v550
    %625 = vmatprep.subr.bf16.mxu0 0
    %626 = vmatpush1.bf16.msra.mxu0 %v551
    %627 = vmatprep.subr.bf16.mxu0 0
    %628 = vmatpush1.bf16.msra.mxu0 %v552
    %629 = vmatprep.subr.bf16.mxu0 0
    %630 = vmatpush1.bf16.msra.mxu0 %v553
    %631 = vmatprep.subr.bf16.mxu0 0
    %632 = vmatpush1.bf16.msra.mxu0 %v554
    %633 = vmatprep.subr.bf16.mxu0 0
    %634 = vmatpush1.bf16.msra.mxu0 %v555
    %635 = vmatprep.subr.bf16.mxu0 0
    %636 = vmatpush1.bf16.msra.mxu0 %v556
    %637 = vmatprep.mubr.bf16.mxu0 %v339
    %638 = vmatmul.mubr.bf16.gmra.mrb[0].mxu0 %v338
    %v639 = vpop.f32.mrb[0].mxu0
    %v640 = vadd.f32 %v411, %v639
    %v641 = vpop.f32.mrb[0].mxu0
    %v642 = vpop.f32.mrb[0].mxu0
    %v643 = vadd.f32 %v411, %v642
    %v644 = vpop.f32.mrb[0].mxu0
    %645 = vdwg.mxu0
    %646 = vmatprep.subr.bf16.mxu0 0
    %647 = vmatpush1.bf16.msra.mxu0 %v557
    %648 = vmatprep.subr.bf16.mxu0 0
    %649 = vmatpush1.bf16.msra.mxu0 %v558
    %650 = vmatprep.subr.bf16.mxu0 0
    %651 = vmatpush1.bf16.msra.mxu0 %v559
    %652 = vmatprep.subr.bf16.mxu0 0
    %653 = vmatpush1.bf16.msra.mxu0 %v560
    %654 = vmatprep.subr.bf16.mxu0 0
    %655 = vmatpush1.bf16.msra.mxu0 %v561
    %656 = vmatprep.subr.bf16.mxu0 0
    %657 = vmatpush1.bf16.msra.mxu0 %v562
    %658 = vmatprep.subr.bf16.mxu0 0
    %659 = vmatpush1.bf16.msra.mxu0 %v563
    %660 = vmatprep.subr.bf16.mxu0 0
    %661 = vmatpush1.bf16.msra.mxu0 %v564
    %662 = vmatprep.subr.bf16.mxu0 0
    %663 = vmatpush1.bf16.msra.mxu0 %v565
    %664 = vmatprep.subr.bf16.mxu0 0
    %665 = vmatpush1.bf16.msra.mxu0 %v566
    %666 = vmatprep.subr.bf16.mxu0 0
    %667 = vmatpush1.bf16.msra.mxu0 %v567
    %668 = vmatprep.subr.bf16.mxu0 0
    %669 = vmatpush1.bf16.msra.mxu0 %v568
    %670 = vmatprep.subr.bf16.mxu0 0
    %671 = vmatpush1.bf16.msra.mxu0 %v569
    %672 = vmatprep.subr.bf16.mxu0 0
    %673 = vmatpush1.bf16.msra.mxu0 %v570
    %674 = vmatprep.subr.bf16.mxu0 0
    %675 = vmatpush1.bf16.msra.mxu0 %v571
    %676 = vmatprep.subr.bf16.mxu0 0
    %677 = vmatpush1.bf16.msra.mxu0 %v572
    %678 = vmatprep.mubr.bf16.mxu0 %v341
    %679 = vmatmul.mubr.bf16.gmra.mrb[0].mxu0 %v340
    %v680 = vpop.f32.mrb[0].mxu0
    %v681 = vadd.f32 %v640, %v680
    %v682 = vpop.f32.mrb[0].mxu0
    %v683 = vpop.f32.mrb[0].mxu0
    %v684 = vadd.f32 %v643, %v683
    %v685 = vpop.f32.mrb[0].mxu0
    %686 = vdwg.mxu0
    %687 = vst [vmem:[#allocation2] sm:$0xff] %v681
    %688 = vst [vmem:[#allocation2 + $0x8] sm:$0xff] %v684
    // Predicated region
    $region22: #{feed_forward.1} parent=1 // pred_check
      _
    $region23: #{feed_forward.1} parent=1 // pred_check_branch
      %690 = sbr.rel (0) target = $region25
    $region24: #{feed_forward.1} parent=1 // pred_region
      %s692 = ssub.s32 256, 256
      %693 = vsyncadd [#allocation3], %s692
      %s694 = sshll.u32 [#allocation2], 4
      %s695 = int_to_ptr.vmem [resolvable:$true] %s694
      %700 = dma.vmem_to_hbm [thread:$0]  %s695, 256, %s5, [#allocation3], 128, 128, 8
    $region25: #{feed_forward.1} parent=1 // pred_fallthru
      _
    // Predicated region
    $region26: #{feed_forward.1} parent=1 // pred_check
      _
    $region27: #{feed_forward.1} parent=1 // pred_check_branch
      %702 = sbr.rel (0) target = $region29
    $region28: #{feed_forward.1} parent=1 // pred_region
      %703 = dma.done [#allocation3], 256
    $region29: #{feed_forward.1} parent=1 // pred_fallthru
      _
    %704 = vsyncpa [#allocation3], 1

</llo_original>
